<compile_context>
chip_gen: v5e
topology: v5e:2x2
jax: 0.10.0
libtpu: 0.0.40
codegen_flags: <defaults>
</compile_context>

<pallas_src>
import numpy as np
import jax
import jax.numpy as jnp
from jax.experimental import pallas as pl
from jax.experimental.pallas import tpu as pltpu


def _round_up(x, m):
    return ((x + m - 1) // m) * m


def _choose_tile(n_pad):
    """Largest tile in {512, 256, 128} that divides n_pad and leaves >= 2 row
    blocks (so v7x's two TensorCores both get work on the 'parallel' axis)."""
    for cand in (512, 256, 128):
        if n_pad % cand == 0 and n_pad // cand >= 2:
            return cand
    return min(n_pad, 128)


def _pad_cast(a, shape, dtype):
    """Zero-pad `a` up to `shape` and cast to `dtype` in one fused op; no-op when
    nothing changes (avoids an extra full HBM pass over adj in the wrapper)."""
    if a.shape == tuple(shape) and a.dtype == dtype:
        return a
    out = jnp.zeros(shape, dtype)
    return out.at[: a.shape[0], : a.shape[1]].set(a.astype(dtype))


# ---------------------------------------------------------------------------
# Pass 1: support = x @ W   (computed ONCE, not redone per adjacency row block)
# ---------------------------------------------------------------------------
def _support_kernel(x_ref, w_ref, s_ref):
    s_ref[...] = jnp.dot(
        x_ref[...], w_ref[...], preferred_element_type=jnp.float32
    ).astype(s_ref.dtype)


# ---------------------------------------------------------------------------
# Pass 2: out = adj @ support   (reduction over adj columns; reduction axis LAST)
# ---------------------------------------------------------------------------
def _adj_support_kernel(adj_ref, s_ref, o_ref):
    m = pl.program_id(1)

    @pl.when(m == 0)
    def _init():
        o_ref[...] = jnp.zeros_like(o_ref)

    # Accumulate straight into the f32 output block; it stays VMEM-resident across
    # the m axis (same block index), so no separate scratch / finalize copy needed.
    o_ref[...] += jnp.dot(
        adj_ref[...], s_ref[...], preferred_element_type=jnp.float32
    )


@jax.jit
def graph_convolution(x, adj, weight):
    """out = adj @ (x @ weight);  x: (N, F_in), adj: (N, N), weight: (F_in, F_out)."""
    N, f_in = x.shape
    f_out = weight.shape[1]
    assert adj.shape == (N, N)

    n_pad = _round_up(N, 128)
    fi_pad = _round_up(f_in, 128)
    fo_pad = _round_up(f_out, 128)
    T = _choose_tile(n_pad)
    n_blocks = n_pad // T

    # bf16 MXU inputs (halves the dominant adj HBM traffic); accumulation stays f32.
    # Zero padding is exact: padded adj columns / x rows / W rows contribute 0.
    x_p = _pad_cast(x, (n_pad, fi_pad), jnp.bfloat16)
    w_p = _pad_cast(weight, (fi_pad, fo_pad), jnp.bfloat16)
    adj_p = _pad_cast(adj, (n_pad, n_pad), jnp.bfloat16)

    # ---- pass 1: support = x @ W -------------------------------------------
    support = pl.pallas_call(
        _support_kernel,
        out_shape=jax.ShapeDtypeStruct((n_pad, fo_pad), jnp.bfloat16),
        grid_spec=pltpu.PrefetchScalarGridSpec(
            num_scalar_prefetch=0,
            grid=(n_blocks,),
            in_specs=[
                pl.BlockSpec((T, fi_pad), lambda i: (i, 0)),        # x row block
                pl.BlockSpec((fi_pad, fo_pad), lambda i: (0, 0)),   # full weight
            ],
            out_specs=pl.BlockSpec((T, fo_pad), lambda i: (i, 0)),
        ),
        compiler_params=pltpu.CompilerParams(
            dimension_semantics=("parallel",),
            vmem_limit_bytes=32 * 1024 * 1024,
        ),
    )(x_p, w_p)

    # ---- pass 2: out = adj @ support ----------------------------------------
    out_p = pl.pallas_call(
        _adj_support_kernel,
        out_shape=jax.ShapeDtypeStruct((n_pad, fo_pad), jnp.float32),
        grid_spec=pltpu.PrefetchScalarGridSpec(
            num_scalar_prefetch=0,
            grid=(n_blocks, n_blocks),
            in_specs=[
                pl.BlockSpec((T, T), lambda i, m: (i, m)),          # adj tile
                pl.BlockSpec((T, fo_pad), lambda i, m: (m, 0)),     # support rows
            ],
            out_specs=pl.BlockSpec((T, fo_pad), lambda i, m: (i, 0)),
        ),
        compiler_params=pltpu.CompilerParams(
            dimension_semantics=("parallel", "arbitrary"),
            vmem_limit_bytes=32 * 1024 * 1024,
        ),
    )(adj_p, support)

    return out_p[:N, :f_out]


if __name__ == "__main__":
    key = jax.random.PRNGKey(0)
    k_x, k_w, k_a = jax.random.split(key, 3)

    # deliberately NOT multiples of 8/128 so the padding path is exercised
    n_nodes, in_features, out_features = 200, 96, 48

    # node features
    x = jax.random.normal(k_x, (n_nodes, in_features), jnp.float32)

    # weight ~ torch.nn.init.xavier_uniform_
    bound = float(np.sqrt(6.0 / (in_features + out_features)))
    weight = jax.random.uniform(
        k_w, (in_features, out_features), jnp.float32, -bound, bound)

    # symmetric adjacency with self-loops, row-normalized (typical GCN preprocessing)
    a = (jax.random.uniform(k_a, (n_nodes, n_nodes)) < 0.05).astype(jnp.float32)
    a = jnp.maximum(a, a.T)
    a = a + jnp.eye(n_nodes, dtype=jnp.float32)
    adj = a / jnp.sum(a, axis=1, keepdims=True)

    out = graph_convolution(x, adj, weight)
    out = jax.block_until_ready(out)

    # reference: torch forward is mm(adj, mm(input, weight))
    ref = jnp.dot(adj, jnp.dot(x, weight, precision="highest"), precision="highest")
    # tolerance widened slightly for the bf16 MXU-input path (f32 accumulation)
    np.testing.assert_allclose(np.asarray(out), np.asarray(ref), rtol=2e-2, atol=2e-2)
    assert out.shape == (n_nodes, out_features)
    print("KERNEL_OK")
</pallas_src>

<mosaic_0001>
module attributes {stable_mosaic.version = 11 : i64} {
  func.func @_support_kernel(%arg0: i32, %arg1: memref<128x128xbf16, #tpu.memory_space<vmem>>, %arg2: memref<128x128xbf16, #tpu.memory_space<vmem>>, %arg3: memref<128x128xbf16, #tpu.memory_space<vmem>>) attributes {dimension_semantics = [#tpu.dimension_semantics<parallel>], iteration_bounds = array<i64: 2>, scalar_prefetch = 0 : i64, scratch_operands = 0 : i64, tpu.core_type = #tpu.core_type<tc>, window_params = [{transform_indices = @transform_0, window_bounds = array<i64: 128, 128>}, {pipeline_mode = #tpu.pipeline_mode<synchronous>, transform_indices = @transform_1, window_bounds = array<i64: 128, 128>}, {transform_indices = @transform_2, window_bounds = array<i64: 128, 128>}]} {
    %c0 = arith.constant 0 : index
    %c0_0 = arith.constant 0 : index
    %0 = vector.load %arg1[%c0, %c0_0] : memref<128x128xbf16, #tpu.memory_space<vmem>>, vector<128x128xbf16>
    %c0_1 = arith.constant 0 : index
    %c0_2 = arith.constant 0 : index
    %1 = vector.load %arg2[%c0_1, %c0_2] : memref<128x128xbf16, #tpu.memory_space<vmem>>, vector<128x128xbf16>
    %cst = arith.constant dense<0.000000e+00> : vector<128x128xf32>
    %2 = tpu.matmul %0, %1, %cst {dimension_numbers = #tpu.dot_dimension_numbers<[1], [0], [0], [1], [0, 0, 1, 1], [], []>} : vector<128x128xbf16>, vector<128x128xbf16>, vector<128x128xf32> -> vector<128x128xf32>
    %3 = arith.truncf %2 : vector<128x128xf32> to vector<128x128xbf16>
    %c0_3 = arith.constant 0 : index
    %c0_4 = arith.constant 0 : index
    %4 = vector.load %arg3[%c0_3, %c0_4] : memref<128x128xbf16, #tpu.memory_space<vmem>>, vector<128x128xbf16>
    tpu.vector_store %arg3[%c0_3, %c0_4], %3 {strides = array<i32>} : memref<128x128xbf16, #tpu.memory_space<vmem>>, vector<128x128xbf16>,
    return
  }
  func.func @transform_0(%arg0: i32) -> (i32, i32) {
    %c0_i32 = arith.constant 0 : i32
    %c0_i32_0 = arith.constant 0 : i32
    return %arg0, %c0_i32 : i32, i32
  }
  func.func @transform_1(%arg0: i32) -> (i32, i32) {
    %c0_i32 = arith.constant 0 : i32
    %c0_i32_0 = arith.constant 0 : i32
    %c0_i32_1 = arith.constant 0 : i32
    return %c0_i32, %c0_i32_0 : i32, i32
  }
  func.func @transform_2(%arg0: i32) -> (i32, i32) {
    %c0_i32 = arith.constant 0 : i32
    %c0_i32_0 = arith.constant 0 : i32
    return %arg0, %c0_i32 : i32, i32
  }
}

module attributes {stable_mosaic.version = 11 : i64} {
  func.func @_adj_support_kernel(%arg0: i32, %arg1: i32, %arg2: memref<128x128xbf16, #tpu.memory_space<vmem>>, %arg3: memref<128x128xbf16, #tpu.memory_space<vmem>>, %arg4: memref<128x128xf32, #tpu.memory_space<vmem>>) attributes {dimension_semantics = [#tpu.dimension_semantics<parallel>, #tpu.dimension_semantics<arbitrary>], iteration_bounds = array<i64: 2, 2>, scalar_prefetch = 0 : i64, scratch_operands = 0 : i64, tpu.core_type = #tpu.core_type<tc>, window_params = [{transform_indices = @transform_0, window_bounds = array<i64: 128, 128>}, {transform_indices = @transform_1, window_bounds = array<i64: 128, 128>}, {transform_indices = @transform_2, window_bounds = array<i64: 128, 128>}]} {
    %c0_i32 = arith.constant 0 : i32
    %0 = arith.cmpi eq, %arg1, %c0_i32 : i32
    %1 = arith.extui %0 : i1 to i32
    %c0_i32_0 = arith.constant 0 : i32
    %2 = arith.cmpi ne, %1, %c0_i32_0 : i32
    scf.if %2 {
      %cst_8 = arith.constant 0.000000e+00 : f32
      %9 = vector.broadcast %cst_8 : f32 to vector<128x128xf32>
      %c0_9 = arith.constant 0 : index
      %c0_10 = arith.constant 0 : index
      %10 = vector.load %arg4[%c0_9, %c0_10] : memref<128x128xf32, #tpu.memory_space<vmem>>, vector<128x128xf32>
      tpu.vector_store %arg4[%c0_9, %c0_10], %9 {strides = array<i32>} : memref<128x128xf32, #tpu.memory_space<vmem>>, vector<128x128xf32>,
    } else {
    }
    %c0 = arith.constant 0 : index
    %c0_1 = arith.constant 0 : index
    %3 = vector.load %arg4[%c0, %c0_1] : memref<128x128xf32, #tpu.memory_space<vmem>>, vector<128x128xf32>
    %c0_2 = arith.constant 0 : index
    %c0_3 = arith.constant 0 : index
    %4 = vector.load %arg2[%c0_2, %c0_3] : memref<128x128xbf16, #tpu.memory_space<vmem>>, vector<128x128xbf16>
    %c0_4 = arith.constant 0 : index
    %c0_5 = arith.constant 0 : index
    %5 = vector.load %arg3[%c0_4, %c0_5] : memref<128x128xbf16, #tpu.memory_space<vmem>>, vector<128x128xbf16>
    %cst = arith.constant dense<0.000000e+00> : vector<128x128xf32>
    %6 = tpu.matmul %4, %5, %cst {dimension_numbers = #tpu.dot_dimension_numbers<[1], [0], [0], [1], [0, 0, 1, 1], [], []>} : vector<128x128xbf16>, vector<128x128xbf16>, vector<128x128xf32> -> vector<128x128xf32>
    %7 = arith.addf %3, %6 : vector<128x128xf32>
    %c0_6 = arith.constant 0 : index
    %c0_7 = arith.constant 0 : index
    %8 = vector.load %arg4[%c0_6, %c0_7] : memref<128x128xf32, #tpu.memory_space<vmem>>, vector<128x128xf32>
    tpu.vector_store %arg4[%c0_6, %c0_7], %7 {strides = array<i32>} : memref<128x128xf32, #tpu.memory_space<vmem>>, vector<128x128xf32>,
    return
  }
  func.func @transform_0(%arg0: i32, %arg1: i32) -> (i32, i32) {
    %c0_i32 = arith.constant 0 : i32
    return %arg0, %arg1 : i32, i32
  }
  func.func @transform_1(%arg0: i32, %arg1: i32) -> (i32, i32) {
    %c0_i32 = arith.constant 0 : i32
    %c0_i32_0 = arith.constant 0 : i32
    return %arg1, %c0_i32 : i32, i32
  }
  func.func @transform_2(%arg0: i32, %arg1: i32) -> (i32, i32) {
    %c0_i32 = arith.constant 0 : i32
    %c0_i32_0 = arith.constant 0 : i32
    return %arg0, %c0_i32 : i32, i32
  }
}

</mosaic_0001>

<llo_original>
// kernel: graph_convolution.3
$region0: #{graph_convolution.3}
  #allocation0 [shape = 'u32[]', space=smem, size = 0x4, offset = 0x4, fixed_abs, tag = 'smem constant byte address 0x4 - core index']
  #allocation1 [shape = 'u32[72,128]{1,0:T(1,128)}', space=vmem, size = 0x9000, scoped, tag = 'internal scratch']
  %s0 = inlined_call_operand.vmem [shape: bf16[256,256], index: 0, kind: input, shape index: {}]
  %s1 = inlined_call_operand.vmem [shape: bf16[256,128], index: 1, kind: input, shape index: {}]
  %s2 = inlined_call_operand.vmem [shape: f32[256,128], index: 2, kind: output, shape index: {}]
  %s3 = sld [smem:[#allocation0]]
  $region86: #{graph_convolution.3} parent=0
    _
  %s5 = ssub.s32 1, %s3
  %s6 = scalar_select 0, %s5, %s3
  $region1: #{graph_convolution.3} parent=0
    #allocation2 [shape = 'u8[65536]{0}', space=vmem, size = 0x10000, scoped, tag = 'input window, operand 0']
    loop: start=0, step=1, limit=6
    $region2: #{graph_convolution.3} parent=1 // loop_pre_header
      _
    $region3: #{graph_convolution.3} parent=1 // loop_header
      %s8 = sphi 0, %s12
      %p9 = scmp.ge.s32.totalorder %s8, 6
      %s15 = sphi 0, %s27
      %s16 = sphi 0, %s23
      %s17 = sphi 0, %s15
      %s18 = sphi 0, %s16
      %s19 = sphi 0, %s17
      %s20 = sphi 0, %s18
      %s32 = sphi 0, %s34
      %s35 = sphi 0, %s32
      %s36 = sphi 0, %s35
      %s52 = sphi 0, %s36
      %s58 = sphi 0, %s60
      %s61 = sphi 0, %s58
      %s62 = sphi 0, %s61
      %s78 = sphi 0, %s62
      %s84 = sphi 0, %s86
      %s87 = sphi 0, %s84
      %s88 = sphi 0, %s87
      %s104 = sphi 0, %s88
    $region4: #{graph_convolution.3} parent=1 // loop_header_branch
      %11 = sbr.rel (%p9) target = $region8
    $region5: #{graph_convolution.3} parent=1 // loop_body
      %s13 = ssub.s32 %s8, 1
      %s14 = ssub.s32 %s8, 2
      %s21 = sadd.s32 1, %s16
      %p22 = scmp.ge.s32.totalorder %s21, 2
      %s23 = scalar_select %p22, 0, %s21
      %s24 = sadd.s32 1, %s15
      %s25 = scalar_select %p22, %s24, %s15
      %p26 = scmp.ge.s32.totalorder %s25, 2
      %s27 = scalar_select %p26, 0, %s25
      %s28 = ssub.s32 %s15, %s27
      %s29 = ssub.s32 %s16, %s23
      %s30 = sor.u32 %s28, %s29
      %p31 = scmp.eq.s32.totalorder %s30, 0
      %s33 = sadd.s32 %s32, 1
      %s34 = scalar_select %p31, %s32, %s33
      %p37 = pneg %p31
      %p38 = scmp.eq.s32.totalorder %s8, 3
      %p39 = por %p37, %p38
      %p40 = scmp.ne.s32.totalorder %s32, %s35
      %p41 = scmp.eq.s32.totalorder %s8, 0
      %p42 = por %p40, %p41
      %p43 = scmp.ne.s32.totalorder %s32, %s35
      %p44 = scmp.eq.s32.totalorder %s13, 3
      %p45 = por %p43, %p44
      %p46 = scmp.ne.s32.totalorder %s35, %s36
      %p47 = scmp.eq.s32.totalorder %s13, 0
      %p48 = por %p46, %p47
      %p49 = scmp.ne.s32.totalorder %s35, %s36
      %p50 = scmp.eq.s32.totalorder %s14, 3
      %p51 = por %p49, %p50
      %p53 = scmp.ne.s32.totalorder %s36, %s52
      %p54 = scmp.eq.s32.totalorder %s14, 0
      %p55 = por %p53, %p54
      %s56 = ssub.s32 %s16, %s23
      %p57 = scmp.eq.s32.totalorder %s56, 0
      %s59 = sadd.s32 %s58, 1
      %s60 = scalar_select %p57, %s58, %s59
      %p63 = pneg %p57
      %p64 = scmp.eq.s32.totalorder %s8, 3
      %p65 = por %p63, %p64
      %p66 = scmp.ne.s32.totalorder %s58, %s61
      %p67 = scmp.eq.s32.totalorder %s8, 0
      %p68 = por %p66, %p67
      %p69 = scmp.ne.s32.totalorder %s58, %s61
      %p70 = scmp.eq.s32.totalorder %s13, 3
      %p71 = por %p69, %p70
      %p72 = scmp.ne.s32.totalorder %s61, %s62
      %p73 = scmp.eq.s32.totalorder %s13, 0
      %p74 = por %p72, %p73
      %p75 = scmp.ne.s32.totalorder %s61, %s62
      %p76 = scmp.eq.s32.totalorder %s14, 3
      %p77 = por %p75, %p76
      %p79 = scmp.ne.s32.totalorder %s62, %s78
      %p80 = scmp.eq.s32.totalorder %s14, 0
      %p81 = por %p79, %p80
      %s82 = ssub.s32 %s15, %s27
      %p83 = scmp.eq.s32.totalorder %s82, 0
      %s85 = sadd.s32 %s84, 1
      %s86 = scalar_select %p83, %s84, %s85
      %p89 = pneg %p83
      %p90 = scmp.eq.s32.totalorder %s8, 3
      %p91 = por %p89, %p90
      %p92 = scmp.ne.s32.totalorder %s84, %s87
      %p93 = scmp.eq.s32.totalorder %s8, 0
      %p94 = por %p92, %p93
      %p95 = scmp.ne.s32.totalorder %s84, %s87
      %p96 = scmp.eq.s32.totalorder %s13, 3
      %p97 = por %p95, %p96
      %p98 = scmp.ne.s32.totalorder %s87, %s88
      %p99 = scmp.eq.s32.totalorder %s13, 0
      %p100 = por %p98, %p99
      %p101 = scmp.ne.s32.totalorder %s87, %s88
      %p102 = scmp.eq.s32.totalorder %s14, 3
      %p103 = por %p101, %p102
      %p105 = scmp.ne.s32.totalorder %s88, %s104
      %p106 = scmp.eq.s32.totalorder %s14, 0
      %p107 = por %p105, %p106
      %p108 = scmp.le.s32.totalorder 1, %s8
      %p109 = scmp.lt.s32.totalorder %s8, 5
      %p110 = pnand %p108, %p109
      %p111 = pneg %p110
      // Predicated region
      $region9: #{graph_convolution.3} parent=5 // pred_check
        _
      $region10: #{graph_convolution.3} parent=5 // pred_check_branch
        %113 = sbr.rel (%p110) target = $region12
      $region11: #{graph_convolution.3} parent=5 // pred_region
        %s114 = ssub.s32 %s8, 1
      $region12: #{graph_convolution.3} parent=5 // pred_fallthru
        _
      %p115 = scmp.lt.s32.totalorder %s8, 4
      // Predicated region
      $region13: #{graph_convolution.3} parent=5 // pred_check
        %p116 = pneg %p115
      $region14: #{graph_convolution.3} parent=5 // pred_check_branch
        %118 = sbr.rel (%p116) target = $region16
      $region15: #{graph_convolution.3} parent=5 // pred_region
        // Predicated region
        $region17: #{graph_convolution.3} parent=15 // pred_check
          %p119 = pneg %p42
        $region18: #{graph_convolution.3} parent=15 // pred_check_branch
          %121 = sbr.rel (%p119) target = $region20
        $region19: #{graph_convolution.3} parent=15 // pred_region
          %s122 = sand.u32 %s32, 1
          %s123 = sand.u32 %s32, 1
          %s124 = smul.addr %s123, 64
          %s125 = scalar_lea.vmem [#allocation2], %s124
          %s126 = smul.u32 16, %s15
          %s127 = smul.addr %s126, 2
          %s128 = sadd.s32 %s16, %s127
          %s129 = smul.addr %s128, 4
          %s130 = scalar_lea.vmem %s0, %s129
          // Predicated region
          $region21: #{graph_convolution.3} parent=19 // pred_check
            _
          $region22: #{graph_convolution.3} parent=19 // pred_check_branch
            %132 = sbr.rel (0) target = $region24
          $region23: #{graph_convolution.3} parent=19 // pred_region
            // Predicated region
            $region25: #{graph_convolution.3} parent=23 // pred_check
              _
            $region26: #{graph_convolution.3} parent=23 // pred_check_branch
              %134 = sbr.rel target = $region28
            $region27: #{graph_convolution.3} parent=23 // pred_region
              // Predicated region
              $region40: #{graph_convolution.3} parent=27 // pred_check
                _
              $region41: #{graph_convolution.3} parent=27 // pred_check_branch
                %180 = sbr.rel (0) target = $region43
              $region42: #{graph_convolution.3} parent=27 // pred_region
                loop: start=0, step=1, limit=1
                $region44: #{graph_convolution.3} parent=42 // loop_pre_header
                  _
                $region45: #{graph_convolution.3} parent=42 // loop_header
                  %s182 = sphi 0, %s186
                  %p183 = scmp.ge.s32.totalorder %s182, 1
                  %s187 = sphi %s130, %s130
                  %s188 = sphi %s125, %s125
                $region46: #{graph_convolution.3} parent=42 // loop_header_branch
                  %185 = sbr.rel (%p183) target = $region50
                $region47: #{graph_convolution.3} parent=42 // loop_body
                  _
                $region48: #{graph_convolution.3} parent=42 // loop_footer
                  %s186 = sadd.s32 1, %s182
                $region49: #{graph_convolution.3} parent=42 // loop_footer_branch
                  %181 = sbr.rel target = $region45
                $region50: #{graph_convolution.3} parent=42 // loop_exit
                  _
                %s190 = ssub.s32 16, 1
                loop: start=0, step=1, limit=1
                $region51: #{graph_convolution.3} parent=42 // loop_pre_header
                  _
                $region52: #{graph_convolution.3} parent=42 // loop_header
                  %s192 = sphi 0, %s196
                  %p193 = scmp.ge.s32.totalorder %s192, 1
                  %s197 = sphi %s130, %s130
                  %s198 = sphi %s125, %s125
                $region53: #{graph_convolution.3} parent=42 // loop_header_branch
                  %195 = sbr.rel (%p193) target = $region57
                $region54: #{graph_convolution.3} parent=42 // loop_body
                  %v199 = vld [vmem:[%s197] sm:%s190]
                  %200 = vst [vmem:[%s198] sm:%s190] %v199
                  %v201 = vld [vmem:[%s197 + $0x8] sm:%s190]
                  %202 = vst [vmem:[%s198 + $0x4] sm:%s190] %v201
                  %v203 = vld [vmem:[%s197 + $0x10] sm:%s190]
                  %204 = vst [vmem:[%s198 + $0x8] sm:%s190] %v203
                  %v205 = vld [vmem:[%s197 + $0x18] sm:%s190]
                  %206 = vst [vmem:[%s198 + $0xc] sm:%s190] %v205
                  %v207 = vld [vmem:[%s197 + $0x20] sm:%s190]
                  %208 = vst [vmem:[%s198 + $0x10] sm:%s190] %v207
                  %v209 = vld [vmem:[%s197 + $0x28] sm:%s190]
                  %210 = vst [vmem:[%s198 + $0x14] sm:%s190] %v209
                  %v211 = vld [vmem:[%s197 + $0x30] sm:%s190]
                  %212 = vst [vmem:[%s198 + $0x18] sm:%s190] %v211
                  %v213 = vld [vmem:[%s197 + $0x38] sm:%s190]
                  %214 = vst [vmem:[%s198 + $0x1c] sm:%s190] %v213
                  %v215 = vld [vmem:[%s197 + $0x40] sm:%s190]
                  %216 = vst [vmem:[%s198 + $0x20] sm:%s190] %v215
                  %v217 = vld [vmem:[%s197 + $0x48] sm:%s190]
                  %218 = vst [vmem:[%s198 + $0x24] sm:%s190] %v217
                  %v219 = vld [vmem:[%s197 + $0x50] sm:%s190]
                  %220 = vst [vmem:[%s198 + $0x28] sm:%s190] %v219
                  %v221 = vld [vmem:[%s197 + $0x58] sm:%s190]
                  %222 = vst [vmem:[%s198 + $0x2c] sm:%s190] %v221
                  %v223 = vld [vmem:[%s197 + $0x60] sm:%s190]
                  %224 = vst [vmem:[%s198 + $0x30] sm:%s190] %v223
                  %v225 = vld [vmem:[%s197 + $0x68] sm:%s190]
                  %226 = vst [vmem:[%s198 + $0x34] sm:%s190] %v225
                  %v227 = vld [vmem:[%s197 + $0x70] sm:%s190]
                  %228 = vst [vmem:[%s198 + $0x38] sm:%s190] %v227
                  %v229 = vld [vmem:[%s197 + $0x78] sm:%s190]
                  %230 = vst [vmem:[%s198 + $0x3c] sm:%s190] %v229
                $region55: #{graph_convolution.3} parent=42 // loop_footer
                  %s196 = sadd.s32 1, %s192
                $region56: #{graph_convolution.3} parent=42 // loop_footer_branch
                  %191 = sbr.rel target = $region52
                $region57: #{graph_convolution.3} parent=42 // loop_exit
                  _
              $region43: #{graph_convolution.3} parent=27 // pred_fallthru
                _
            $region28: #{graph_convolution.3} parent=23 // pred_fallthru
              _
            // Predicated region
            $region29: #{graph_convolution.3} parent=23 // pred_check
              _
            $region30: #{graph_convolution.3} parent=23 // pred_check_branch
              %136 = sbr.rel (0) target = $region32
            $region31: #{graph_convolution.3} parent=23 // pred_region
              %s138 = ssub.s32 16, 1
              loop: start=0, step=1, limit=1
              $region33: #{graph_convolution.3} parent=31 // loop_pre_header
                _
              $region34: #{graph_convolution.3} parent=31 // loop_header
                %s140 = sphi 0, %s144
                %p141 = scmp.ge.s32.totalorder %s140, 1
                %s145 = sphi %s130, %s130
                %s146 = sphi %s125, %s125
              $region35: #{graph_convolution.3} parent=31 // loop_header_branch
                %143 = sbr.rel (%p141) target = $region39
              $region36: #{graph_convolution.3} parent=31 // loop_body
                %v147 = vld [vmem:[%s145] sm:%s138]
                %148 = vst [vmem:[%s146] sm:%s138] %v147
                %v149 = vld [vmem:[%s145 + $0x8] sm:%s138]
                %150 = vst [vmem:[%s146 + $0x4] sm:%s138] %v149
                %v151 = vld [vmem:[%s145 + $0x10] sm:%s138]
                %152 = vst [vmem:[%s146 + $0x8] sm:%s138] %v151
                %v153 = vld [vmem:[%s145 + $0x18] sm:%s138]
                %154 = vst [vmem:[%s146 + $0xc] sm:%s138] %v153
                %v155 = vld [vmem:[%s145 + $0x20] sm:%s138]
                %156 = vst [vmem:[%s146 + $0x10] sm:%s138] %v155
                %v157 = vld [vmem:[%s145 + $0x28] sm:%s138]
                %158 = vst [vmem:[%s146 + $0x14] sm:%s138] %v157
                %v159 = vld [vmem:[%s145 + $0x30] sm:%s138]
                %160 = vst [vmem:[%s146 + $0x18] sm:%s138] %v159
                %v161 = vld [vmem:[%s145 + $0x38] sm:%s138]
                %162 = vst [vmem:[%s146 + $0x1c] sm:%s138] %v161
                %v163 = vld [vmem:[%s145 + $0x40] sm:%s138]
                %164 = vst [vmem:[%s146 + $0x20] sm:%s138] %v163
                %v165 = vld [vmem:[%s145 + $0x48] sm:%s138]
                %166 = vst [vmem:[%s146 + $0x24] sm:%s138] %v165
                %v167 = vld [vmem:[%s145 + $0x50] sm:%s138]
                %168 = vst [vmem:[%s146 + $0x28] sm:%s138] %v167
                %v169 = vld [vmem:[%s145 + $0x58] sm:%s138]
                %170 = vst [vmem:[%s146 + $0x2c] sm:%s138] %v169
                %v171 = vld [vmem:[%s145 + $0x60] sm:%s138]
                %172 = vst [vmem:[%s146 + $0x30] sm:%s138] %v171
                %v173 = vld [vmem:[%s145 + $0x68] sm:%s138]
                %174 = vst [vmem:[%s146 + $0x34] sm:%s138] %v173
                %v175 = vld [vmem:[%s145 + $0x70] sm:%s138]
                %176 = vst [vmem:[%s146 + $0x38] sm:%s138] %v175
                %v177 = vld [vmem:[%s145 + $0x78] sm:%s138]
                %178 = vst [vmem:[%s146 + $0x3c] sm:%s138] %v177
              $region37: #{graph_convolution.3} parent=31 // loop_footer
                %s144 = sadd.s32 1, %s140
              $region38: #{graph_convolution.3} parent=31 // loop_footer_branch
                %139 = sbr.rel target = $region34
              $region39: #{graph_convolution.3} parent=31 // loop_exit
                _
            $region32: #{graph_convolution.3} parent=23 // pred_fallthru
              _
          $region24: #{graph_convolution.3} parent=19 // pred_fallthru
            _
          %231 = vnop
        $region20: #{graph_convolution.3} parent=15 // pred_fallthru
          _
        // Predicated region
        $region58: #{graph_convolution.3} parent=15 // pred_check
          %p232 = pneg %p68
        $region59: #{graph_convolution.3} parent=15 // pred_check_branch
          %234 = sbr.rel (%p232) target = $region61
        $region60: #{graph_convolution.3} parent=15 // pred_region
          %s235 = smul.u32 16, %s16
          %p236 = scmp.lt.s32.totalorder %s235, 31
          %s237 = scalar_select %p236, %s235, 31
          %s238 = smul.addr %s237, 4
          %s239 = scalar_lea.vmem %s1, %s238
          %s240 = smul.u32 16, %s16
        $region61: #{graph_convolution.3} parent=15 // pred_fallthru
          _
      $region16: #{graph_convolution.3} parent=5 // pred_fallthru
        _
      %p241 = scmp.le.s32.totalorder 1, %s8
      %p242 = scmp.lt.s32.totalorder %s8, 5
      %p243 = pnand %p241, %p242
      %p244 = pneg %p243
      // Predicated region
      $region62: #{graph_convolution.3} parent=5 // pred_check
        _
      $region63: #{graph_convolution.3} parent=5 // pred_check_branch
        %246 = sbr.rel (%p243) target = $region65
      $region64: #{graph_convolution.3} parent=5 // pred_region
        %s247 = ssub.s32 %s8, 1
        %s248 = sand.u32 %s35, 1
        %s249 = sand.u32 %s35, 1
        %s250 = smul.addr %s249, 64
        %s251 = scalar_lea.vmem [#allocation2], %s250
        // Predicated region
        $region66: #{graph_convolution.3} parent=64 // pred_check
          %p252 = pneg %p48
        $region67: #{graph_convolution.3} parent=64 // pred_check_branch
          %254 = sbr.rel (%p252) target = $region69
        $region68: #{graph_convolution.3} parent=64 // pred_region
          _
        $region69: #{graph_convolution.3} parent=64 // pred_fallthru
          _
        %s255 = sand.u32 %s35, 1
        %s256 = sand.u32 %s35, 1
        %s257 = smul.addr %s256, 64
        %s258 = scalar_lea.vmem [#allocation2], %s257
        %p259 = pneg %p48
        %p260 = pneg %p45
        %s261 = smul.u32 16, %s18
        %p262 = scmp.lt.s32.totalorder %s261, 31
        %s263 = scalar_select %p262, %s261, 31
        %s264 = smul.addr %s263, 4
        %s265 = scalar_lea.vmem %s1, %s264
        %p266 = pneg %p74
        %p267 = pneg %p71
        %p268 = pneg %p100
        %p269 = pneg %p97
        %s270 = smul.u32 16, %s17
        %p271 = scmp.lt.s32.totalorder %s270, 31
        %s272 = scalar_select %p271, %s270, 31
        %s273 = smul.addr %s272, 8
        %s274 = scalar_lea.vmem %s2, %s273
        %s275 = smul.u32 16, %s17
        %s276 = smul.u32 16, %s18
        %p277 = scmp.lt.s32.totalorder %s276, 31
        %s278 = scalar_select %p277, %s276, 31
        %s279 = smul.addr %s278, 4
        %s280 = scalar_lea.vmem %s1, %s279
        %s281 = smul.u32 16, %s18
        %s282 = smul.u32 16, %s17
        %p283 = scmp.lt.s32.totalorder %s282, 31
        %s284 = scalar_select %p283, %s282, 31
        %s285 = smul.addr %s284, 8
        %s286 = scalar_lea.vmem %s2, %s285
        %s287 = smul.u32 16, %s17
        %p288 = scmp.eq.s32.totalorder %s18, 0
        // Predicated region
        $region70: #{graph_convolution.3} parent=64 // pred_check
          %p289 = pneg %p288
        $region71: #{graph_convolution.3} parent=64 // pred_check_branch
          %291 = sbr.rel (%p289) target = $region73
        $region72: #{graph_convolution.3} parent=64 // pred_region
          %292 = vst [vmem:[%s286] sm:$0xff] 0.0
          %293 = vst [vmem:[%s286 + $0x8] sm:$0xff] 0.0
          %294 = vst [vmem:[%s286 + $0x10] sm:$0xff] 0.0
          %295 = vst [vmem:[%s286 + $0x18] sm:$0xff] 0.0
          %296 = vst [vmem:[%s286 + $0x20] sm:$0xff] 0.0
          %297 = vst [vmem:[%s286 + $0x28] sm:$0xff] 0.0
          %298 = vst [vmem:[%s286 + $0x30] sm:$0xff] 0.0
          %299 = vst [vmem:[%s286 + $0x38] sm:$0xff] 0.0
          %300 = vst [vmem:[%s286 + $0x40] sm:$0xff] 0.0
          %301 = vst [vmem:[%s286 + $0x48] sm:$0xff] 0.0
          %302 = vst [vmem:[%s286 + $0x50] sm:$0xff] 0.0
          %303 = vst [vmem:[%s286 + $0x58] sm:$0xff] 0.0
          %304 = vst [vmem:[%s286 + $0x60] sm:$0xff] 0.0
          %305 = vst [vmem:[%s286 + $0x68] sm:$0xff] 0.0
          %306 = vst [vmem:[%s286 + $0x70] sm:$0xff] 0.0
          %307 = vst [vmem:[%s286 + $0x78] sm:$0xff] 0.0
        $region73: #{graph_convolution.3} parent=64 // pred_fallthru
          _
        %v308 = vld [vmem:[%s286] sm:$0xff]
        %v309 = vld [vmem:[%s286 + $0x8] sm:$0xff]
        %v310 = vld [vmem:[%s286 + $0x10] sm:$0xff]
        %v311 = vld [vmem:[%s286 + $0x18] sm:$0xff]
        %v312 = vld [vmem:[%s286 + $0x20] sm:$0xff]
        %v313 = vld [vmem:[%s286 + $0x28] sm:$0xff]
        %v314 = vld [vmem:[%s286 + $0x30] sm:$0xff]
        %v315 = vld [vmem:[%s286 + $0x38] sm:$0xff]
        %v316 = vld [vmem:[%s286 + $0x40] sm:$0xff]
        %v317 = vld [vmem:[%s286 + $0x48] sm:$0xff]
        %v318 = vld [vmem:[%s286 + $0x50] sm:$0xff]
        %v319 = vld [vmem:[%s286 + $0x58] sm:$0xff]
        %v320 = vld [vmem:[%s286 + $0x60] sm:$0xff]
        %v321 = vld [vmem:[%s286 + $0x68] sm:$0xff]
        %v322 = vld [vmem:[%s286 + $0x70] sm:$0xff]
        %v323 = vld [vmem:[%s286 + $0x78] sm:$0xff]
        %v324 = vld [vmem:[%s251] sm:$0xf]
        %v325 = vld [vmem:[%s251 + $0x4] sm:$0xf]
        %v326 = vld [vmem:[%s251 + $0x8] sm:$0xf]
        %v327 = vld [vmem:[%s251 + $0xc] sm:$0xf]
        %v328 = vld [vmem:[%s251 + $0x10] sm:$0xf]
        %v329 = vld [vmem:[%s251 + $0x14] sm:$0xf]
        %v330 = vld [vmem:[%s251 + $0x18] sm:$0xf]
        %v331 = vld [vmem:[%s251 + $0x1c] sm:$0xf]
        %v332 = vld [vmem:[%s251 + $0x20] sm:$0xf]
        %v333 = vld [vmem:[%s251 + $0x24] sm:$0xf]
        %v334 = vld [vmem:[%s251 + $0x28] sm:$0xf]
        %v335 = vld [vmem:[%s251 + $0x2c] sm:$0xf]
        %v336 = vld [vmem:[%s251 + $0x30] sm:$0xf]
        %v337 = vld [vmem:[%s251 + $0x34] sm:$0xf]
        %v338 = vld [vmem:[%s251 + $0x38] sm:$0xf]
        %v339 = vld [vmem:[%s251 + $0x3c] sm:$0xf]
        %v340 = vld [vmem:[%s280] sm:$0xf]
        %v341 = vld [vmem:[%s280 + $0x4] sm:$0xf]
        %v342 = vld [vmem:[%s280 + $0x8] sm:$0xf]
        %v343 = vld [vmem:[%s280 + $0xc] sm:$0xf]
        %v344 = vld [vmem:[%s280 + $0x10] sm:$0xf]
        %v345 = vld [vmem:[%s280 + $0x14] sm:$0xf]
        %v346 = vld [vmem:[%s280 + $0x18] sm:$0xf]
        %v347 = vld [vmem:[%s280 + $0x1c] sm:$0xf]
        %v348 = vld [vmem:[%s280 + $0x20] sm:$0xf]
        %v349 = vld [vmem:[%s280 + $0x24] sm:$0xf]
        %v350 = vld [vmem:[%s280 + $0x28] sm:$0xf]
        %v351 = vld [vmem:[%s280 + $0x2c] sm:$0xf]
        %v352 = vld [vmem:[%s280 + $0x30] sm:$0xf]
        %v353 = vld [vmem:[%s280 + $0x34] sm:$0xf]
        %v354 = vld [vmem:[%s280 + $0x38] sm:$0xf]
        %v355 = vld [vmem:[%s280 + $0x3c] sm:$0xf]
        %v372 = vunpack.c.l.b16 %v324
        %v373 = vunpack.c.l.b16 %v325
        %v374 = vunpack.c.l.b16 %v326
        %v375 = vunpack.c.l.b16 %v327
        %v376 = vunpack.c.l.b16 %v328
        %v377 = vunpack.c.l.b16 %v329
        %v378 = vunpack.c.l.b16 %v330
        %v379 = vunpack.c.l.b16 %v331
        %v380 = vunpack.c.l.b16 %v332
        %v381 = vunpack.c.l.b16 %v333
        %v382 = vunpack.c.l.b16 %v334
        %v383 = vunpack.c.l.b16 %v335
        %v384 = vunpack.c.l.b16 %v336
        %v385 = vunpack.c.l.b16 %v337
        %v386 = vunpack.c.l.b16 %v338
        %v387 = vunpack.c.l.b16 %v339
        %v388 = vpack.c.b16 %v373, %v372
        %v389 = vpack.c.b16 %v375, %v374
        %v390 = vpack.c.b16 %v377, %v376
        %v391 = vpack.c.b16 %v379, %v378
        %v392 = vpack.c.b16 %v381, %v380
        %v393 = vpack.c.b16 %v383, %v382
        %v394 = vpack.c.b16 %v385, %v384
        %v395 = vpack.c.b16 %v387, %v386
        %v420 = vunpack.c.l.b16 %v340
        %v421 = vunpack.c.l.b16 %v341
        %v422 = vunpack.c.l.b16 %v342
        %v423 = vunpack.c.l.b16 %v343
        %v424 = vunpack.c.l.b16 %v344
        %v425 = vunpack.c.l.b16 %v345
        %v426 = vunpack.c.l.b16 %v346
        %v427 = vunpack.c.l.b16 %v347
        %v428 = vunpack.c.l.b16 %v348
        %v429 = vunpack.c.l.b16 %v349
        %v430 = vunpack.c.l.b16 %v350
        %v431 = vunpack.c.l.b16 %v351
        %v432 = vunpack.c.l.b16 %v352
        %v433 = vunpack.c.l.b16 %v353
        %v434 = vunpack.c.l.b16 %v354
        %v435 = vunpack.c.l.b16 %v355
        %v436 = vpack.c.b16 %v421, %v420
        %v437 = vpack.c.b16 %v423, %v422
        %v438 = vpack.c.b16 %v425, %v424
        %v439 = vpack.c.b16 %v427, %v426
        %v440 = vpack.c.b16 %v429, %v428
        %v441 = vpack.c.b16 %v431, %v430
        %v442 = vpack.c.b16 %v433, %v432
        %v443 = vpack.c.b16 %v435, %v434
        %452 = vmatpush.bf16.msra.mxu0 %v443
        %453 = vmatpush.bf16.msra.mxu0 %v442
        %454 = vmatpush.bf16.msra.mxu0 %v441
        %455 = vmatpush.bf16.msra.mxu0 %v440
        %456 = vmatpush.bf16.msra.mxu0 %v439
        %457 = vmatpush.bf16.msra.mxu0 %v438
        %458 = vmatpush.bf16.msra.mxu0 %v437
        %459 = vmatpush.bf16.msra.mxu0 %v436
        %460 = vmatmul.bf16.gmra.mxu0 %v388
        %v461 = vpop.f32.mrf.mxu0
        %v462 = vadd.f32 0.0, %v461
        %v463 = vpop.f32.mrf.mxu0
        %v464 = vadd.f32 0.0, %v463
        %465 = vmatmul.bf16.gmra.mxu0 %v389
        %v466 = vpop.f32.mrf.mxu0
        %v467 = vadd.f32 0.0, %v466
        %v468 = vpop.f32.mrf.mxu0
        %v469 = vadd.f32 0.0, %v468
        %470 = vmatmul.bf16.gmra.mxu0 %v390
        %v471 = vpop.f32.mrf.mxu0
        %v472 = vadd.f32 0.0, %v471
        %v473 = vpop.f32.mrf.mxu0
        %v474 = vadd.f32 0.0, %v473
        %475 = vmatmul.bf16.gmra.mxu0 %v391
        %v476 = vpop.f32.mrf.mxu0
        %v477 = vadd.f32 0.0, %v476
        %v478 = vpop.f32.mrf.mxu0
        %v479 = vadd.f32 0.0, %v478
        %480 = vmatmul.bf16.gmra.mxu0 %v392
        %v481 = vpop.f32.mrf.mxu0
        %v482 = vadd.f32 0.0, %v481
        %v483 = vpop.f32.mrf.mxu0
        %v484 = vadd.f32 0.0, %v483
        %485 = vmatmul.bf16.gmra.mxu0 %v393
        %v486 = vpop.f32.mrf.mxu0
        %v487 = vadd.f32 0.0, %v486
        %v488 = vpop.f32.mrf.mxu0
        %v489 = vadd.f32 0.0, %v488
        %490 = vmatmul.bf16.gmra.mxu0 %v394
        %v491 = vpop.f32.mrf.mxu0
        %v492 = vadd.f32 0.0, %v491
        %v493 = vpop.f32.mrf.mxu0
        %v494 = vadd.f32 0.0, %v493
        %495 = vmatmul.bf16.gmra.mxu0 %v395
        %v496 = vpop.f32.mrf.mxu0
        %v497 = vadd.f32 0.0, %v496
        %v498 = vpop.f32.mrf.mxu0
        %v499 = vadd.f32 0.0, %v498
        %500 = vdwg.mxu0
        %v501 = vadd.f32 %v308, %v462
        %v502 = vadd.f32 %v309, %v464
        %v503 = vadd.f32 %v310, %v467
        %v504 = vadd.f32 %v311, %v469
        %v505 = vadd.f32 %v312, %v472
        %v506 = vadd.f32 %v313, %v474
        %v507 = vadd.f32 %v314, %v477
        %v508 = vadd.f32 %v315, %v479
        %v509 = vadd.f32 %v316, %v482
        %v510 = vadd.f32 %v317, %v484
        %v511 = vadd.f32 %v318, %v487
        %v512 = vadd.f32 %v319, %v489
        %v513 = vadd.f32 %v320, %v492
        %v514 = vadd.f32 %v321, %v494
        %v515 = vadd.f32 %v322, %v497
        %v516 = vadd.f32 %v323, %v499
        %517 = vst [vmem:[%s286] sm:$0xff] %v501
        %518 = vst [vmem:[%s286 + $0x8] sm:$0xff] %v502
        %519 = vst [vmem:[%s286 + $0x10] sm:$0xff] %v503
        %520 = vst [vmem:[%s286 + $0x18] sm:$0xff] %v504
        %521 = vst [vmem:[%s286 + $0x20] sm:$0xff] %v505
        %522 = vst [vmem:[%s286 + $0x28] sm:$0xff] %v506
        %523 = vst [vmem:[%s286 + $0x30] sm:$0xff] %v507
        %524 = vst [vmem:[%s286 + $0x38] sm:$0xff] %v508
        %525 = vst [vmem:[%s286 + $0x40] sm:$0xff] %v509
        %526 = vst [vmem:[%s286 + $0x48] sm:$0xff] %v510
        %527 = vst [vmem:[%s286 + $0x50] sm:$0xff] %v511
        %528 = vst [vmem:[%s286 + $0x58] sm:$0xff] %v512
        %529 = vst [vmem:[%s286 + $0x60] sm:$0xff] %v513
        %530 = vst [vmem:[%s286 + $0x68] sm:$0xff] %v514
        %531 = vst [vmem:[%s286 + $0x70] sm:$0xff] %v515
        %532 = vst [vmem:[%s286 + $0x78] sm:$0xff] %v516
        %s533 = smul.u32 16, %s17
        %p534 = scmp.lt.s32.totalorder %s533, 31
        %s535 = scalar_select %p534, %s533, 31
        %s536 = smul.addr %s535, 8
        %s537 = scalar_lea.vmem %s2, %s536
        // Predicated region
        $region74: #{graph_convolution.3} parent=64 // pred_check
          %p538 = pneg %p97
        $region75: #{graph_convolution.3} parent=64 // pred_check_branch
          %540 = sbr.rel (%p538) target = $region77
        $region76: #{graph_convolution.3} parent=64 // pred_region
          %s541 = smul.u32 16, %s17
        $region77: #{graph_convolution.3} parent=64 // pred_fallthru
          _
      $region65: #{graph_convolution.3} parent=5 // pred_fallthru
        _
      %p542 = scmp.le.s32.totalorder 2, %s8
      // Predicated region
      $region78: #{graph_convolution.3} parent=5 // pred_check
        %p543 = pneg %p542
      $region79: #{graph_convolution.3} parent=5 // pred_check_branch
        %545 = sbr.rel (%p543) target = $region81
      $region80: #{graph_convolution.3} parent=5 // pred_region
        %s546 = ssub.s32 %s8, 2
        // Predicated region
        $region82: #{graph_convolution.3} parent=80 // pred_check
          %p547 = pneg %p103
        $region83: #{graph_convolution.3} parent=80 // pred_check_branch
          %549 = sbr.rel (%p547) target = $region85
        $region84: #{graph_convolution.3} parent=80 // pred_region
          %s550 = smul.u32 16, %s19
          %p551 = scmp.lt.s32.totalorder %s550, 31
          %s552 = scalar_select %p551, %s550, 31
          %s553 = smul.addr %s552, 8
          %s554 = scalar_lea.vmem %s2, %s553
        $region85: #{graph_convolution.3} parent=80 // pred_fallthru
          _
      $region81: #{graph_convolution.3} parent=5 // pred_fallthru
        _
    $region6: #{graph_convolution.3} parent=1 // loop_footer
      %s12 = sadd.s32 1, %s8
    $region7: #{graph_convolution.3} parent=1 // loop_footer_branch
      %7 = sbr.rel target = $region3
    $region8: #{graph_convolution.3} parent=1 // loop_exit
      _

// kernel: graph_convolution.2
$region0: #{graph_convolution.2}
  #allocation0 [shape = 'u32[]', space=smem, size = 0x4, offset = 0x4, fixed_abs, tag = 'smem constant byte address 0x4 - core index']
  #allocation1 [shape = 'u32[72,128]{1,0:T(1,128)}', space=vmem, size = 0x9000, scoped, tag = 'internal scratch']
  %s0 = inlined_call_operand.vmem [shape: bf16[256,128], index: 0, kind: input, shape index: {}]
  %s1 = inlined_call_operand.vmem [shape: bf16[128,128], index: 1, kind: input, shape index: {}]
  %s2 = inlined_call_operand.vmem [shape: bf16[256,128], index: 2, kind: output, shape index: {}]
  %s3 = sld [smem:[#allocation0]]
  $region41: #{graph_convolution.2} parent=0
    _
  %s5 = ssub.s32 1, %s3
  %s6 = scalar_select 0, %s5, %s3
  loop: start=0, step=1, limit=4
  $region2: #{graph_convolution.2} parent=0 // loop_pre_header
    _
  $region3: #{graph_convolution.2} parent=0 // loop_header
    %s8 = sphi 0, %s12
    %p9 = scmp.ge.s32.totalorder %s8, 4
    %s18 = sphi 0, %s20
    %s21 = sphi 0, %s18
    %s22 = sphi 0, %s21
    %s38 = sphi 0, %s22
    %s42 = sphi 0, %s42
    %s44 = sphi 0, %s42
    %s45 = sphi 0, %s44
    %s59 = sphi 0, %s45
    %s65 = sphi 0, %s67
    %s68 = sphi 0, %s65
    %s69 = sphi 0, %s68
    %s85 = sphi 0, %s69
  $region4: #{graph_convolution.2} parent=0 // loop_header_branch
    %11 = sbr.rel (%p9) target = $region8
  $region5: #{graph_convolution.2} parent=0 // loop_body
    %s13 = ssub.s32 %s8, 1
    %s14 = ssub.s32 %s8, 2
    %s15 = sadd.s32 %s8, 1
    %s16 = ssub.s32 %s8, %s15
    %p17 = scmp.eq.s32.totalorder %s16, 0
    %s19 = sadd.s32 %s18, 1
    %s20 = scalar_select %p17, %s18, %s19
    %p23 = pneg %p17
    %p24 = scmp.eq.s32.totalorder %s8, 1
    %p25 = por %p23, %p24
    %p26 = scmp.ne.s32.totalorder %s18, %s21
    %p27 = scmp.eq.s32.totalorder %s8, 0
    %p28 = por %p26, %p27
    %p29 = scmp.ne.s32.totalorder %s18, %s21
    %p30 = scmp.eq.s32.totalorder %s13, 1
    %p31 = por %p29, %p30
    %p32 = scmp.ne.s32.totalorder %s21, %s22
    %p33 = scmp.eq.s32.totalorder %s13, 0
    %p34 = por %p32, %p33
    %p35 = scmp.ne.s32.totalorder %s21, %s22
    %p36 = scmp.eq.s32.totalorder %s14, 1
    %p37 = por %p35, %p36
    %p39 = scmp.ne.s32.totalorder %s22, %s38
    %p40 = scmp.eq.s32.totalorder %s14, 0
    %p41 = por %p39, %p40
    %s43 = sadd.s32 %s42, 1
    %p46 = scmp.eq.s32.totalorder %s8, 1
    %p47 = scmp.ne.s32.totalorder %s42, %s44
    %p48 = scmp.eq.s32.totalorder %s8, 0
    %p49 = por %p47, %p48
    %p50 = scmp.ne.s32.totalorder %s42, %s44
    %p51 = scmp.eq.s32.totalorder %s13, 1
    %p52 = por %p50, %p51
    %p53 = scmp.ne.s32.totalorder %s44, %s45
    %p54 = scmp.eq.s32.totalorder %s13, 0
    %p55 = por %p53, %p54
    %p56 = scmp.ne.s32.totalorder %s44, %s45
    %p57 = scmp.eq.s32.totalorder %s14, 1
    %p58 = por %p56, %p57
    %p60 = scmp.ne.s32.totalorder %s45, %s59
    %p61 = scmp.eq.s32.totalorder %s14, 0
    %p62 = por %p60, %p61
    %s63 = ssub.s32 %s8, %s15
    %p64 = scmp.eq.s32.totalorder %s63, 0
    %s66 = sadd.s32 %s65, 1
    %s67 = scalar_select %p64, %s65, %s66
    %p70 = pneg %p64
    %p71 = scmp.eq.s32.totalorder %s8, 1
    %p72 = por %p70, %p71
    %p73 = scmp.ne.s32.totalorder %s65, %s68
    %p74 = scmp.eq.s32.totalorder %s8, 0
    %p75 = por %p73, %p74
    %p76 = scmp.ne.s32.totalorder %s65, %s68
    %p77 = scmp.eq.s32.totalorder %s13, 1
    %p78 = por %p76, %p77
    %p79 = scmp.ne.s32.totalorder %s68, %s69
    %p80 = scmp.eq.s32.totalorder %s13, 0
    %p81 = por %p79, %p80
    %p82 = scmp.ne.s32.totalorder %s68, %s69
    %p83 = scmp.eq.s32.totalorder %s14, 1
    %p84 = por %p82, %p83
    %p86 = scmp.ne.s32.totalorder %s69, %s85
    %p87 = scmp.eq.s32.totalorder %s14, 0
    %p88 = por %p86, %p87
    %p89 = scmp.le.s32.totalorder 1, %s8
    %p90 = scmp.lt.s32.totalorder %s8, 3
    %p91 = pnand %p89, %p90
    %p92 = pneg %p91
    // Predicated region
    $region9: #{graph_convolution.2} parent=5 // pred_check
      _
    $region10: #{graph_convolution.2} parent=5 // pred_check_branch
      %94 = sbr.rel (%p91) target = $region12
    $region11: #{graph_convolution.2} parent=5 // pred_region
      %s95 = ssub.s32 %s8, 1
      // Predicated region
      $region13: #{graph_convolution.2} parent=11 // pred_check
        %p96 = pneg %p55
      $region14: #{graph_convolution.2} parent=11 // pred_check_branch
        %98 = sbr.rel (%p96) target = $region16
      $region15: #{graph_convolution.2} parent=11 // pred_region
        _
      $region16: #{graph_convolution.2} parent=11 // pred_fallthru
        _
    $region12: #{graph_convolution.2} parent=5 // pred_fallthru
      _
    %p99 = scmp.lt.s32.totalorder %s8, 2
    // Predicated region
    $region17: #{graph_convolution.2} parent=5 // pred_check
      %p100 = pneg %p99
    $region18: #{graph_convolution.2} parent=5 // pred_check_branch
      %102 = sbr.rel (%p100) target = $region20
    $region19: #{graph_convolution.2} parent=5 // pred_region
      // Predicated region
      $region21: #{graph_convolution.2} parent=19 // pred_check
        %p103 = pneg %p28
      $region22: #{graph_convolution.2} parent=19 // pred_check_branch
        %105 = sbr.rel (%p103) target = $region24
      $region23: #{graph_convolution.2} parent=19 // pred_region
        %s106 = smul.u32 16, %s8
        %p107 = scmp.lt.s32.totalorder %s106, 31
        %s108 = scalar_select %p107, %s106, 31
        %s109 = smul.addr %s108, 4
        %s110 = scalar_lea.vmem %s0, %s109
        %s111 = smul.u32 16, %s8
      $region24: #{graph_convolution.2} parent=19 // pred_fallthru
        _
    $region20: #{graph_convolution.2} parent=5 // pred_fallthru
      _
    %p112 = scmp.le.s32.totalorder 1, %s8
    %p113 = scmp.lt.s32.totalorder %s8, 3
    %p114 = pnand %p112, %p113
    %p115 = pneg %p114
    // Predicated region
    $region25: #{graph_convolution.2} parent=5 // pred_check
      _
    $region26: #{graph_convolution.2} parent=5 // pred_check_branch
      %117 = sbr.rel (%p114) target = $region28
    $region27: #{graph_convolution.2} parent=5 // pred_region
      %s118 = ssub.s32 %s8, 1
      %s119 = smul.u32 16, %s13
      %p120 = scmp.lt.s32.totalorder %s119, 31
      %s121 = scalar_select %p120, %s119, 31
      %s122 = smul.addr %s121, 4
      %s123 = scalar_lea.vmem %s0, %s122
      %p124 = pneg %p34
      %p125 = pneg %p31
      %p126 = pneg %p55
      %p127 = pneg %p52
      %p128 = pneg %p81
      %p129 = pneg %p78
      %s130 = smul.u32 16, %s13
      %p131 = scmp.lt.s32.totalorder %s130, 31
      %s132 = scalar_select %p131, %s130, 31
      %s133 = smul.addr %s132, 4
      %s134 = scalar_lea.vmem %s2, %s133
      %s135 = smul.u32 16, %s13
      %p136 = scmp.lt.s32.totalorder %s135, 31
      %s137 = scalar_select %p136, %s135, 31
      %s138 = smul.addr %s137, 4
      %s139 = scalar_lea.vmem %s0, %s138
      %s140 = smul.u32 16, %s13
      %s141 = smul.u32 16, %s13
      %p142 = scmp.lt.s32.totalorder %s141, 31
      %s143 = scalar_select %p142, %s141, 31
      %s144 = smul.addr %s143, 4
      %s145 = scalar_lea.vmem %s2, %s144
      %s146 = smul.u32 16, %s13
      %v147 = vld [vmem:[%s139] sm:$0xf]
      %v148 = vld [vmem:[%s139 + $0x4] sm:$0xf]
      %v149 = vld [vmem:[%s139 + $0x8] sm:$0xf]
      %v150 = vld [vmem:[%s139 + $0xc] sm:$0xf]
      %v151 = vld [vmem:[%s139 + $0x10] sm:$0xf]
      %v152 = vld [vmem:[%s139 + $0x14] sm:$0xf]
      %v153 = vld [vmem:[%s139 + $0x18] sm:$0xf]
      %v154 = vld [vmem:[%s139 + $0x1c] sm:$0xf]
      %v155 = vld [vmem:[%s139 + $0x20] sm:$0xf]
      %v156 = vld [vmem:[%s139 + $0x24] sm:$0xf]
      %v157 = vld [vmem:[%s139 + $0x28] sm:$0xf]
      %v158 = vld [vmem:[%s139 + $0x2c] sm:$0xf]
      %v159 = vld [vmem:[%s139 + $0x30] sm:$0xf]
      %v160 = vld [vmem:[%s139 + $0x34] sm:$0xf]
      %v161 = vld [vmem:[%s139 + $0x38] sm:$0xf]
      %v162 = vld [vmem:[%s139 + $0x3c] sm:$0xf]
      %v163 = vld [vmem:[%s1] sm:$0xf]
      %v164 = vld [vmem:[%s1 + $0x4] sm:$0xf]
      %v165 = vld [vmem:[%s1 + $0x8] sm:$0xf]
      %v166 = vld [vmem:[%s1 + $0xc] sm:$0xf]
      %v167 = vld [vmem:[%s1 + $0x10] sm:$0xf]
      %v168 = vld [vmem:[%s1 + $0x14] sm:$0xf]
      %v169 = vld [vmem:[%s1 + $0x18] sm:$0xf]
      %v170 = vld [vmem:[%s1 + $0x1c] sm:$0xf]
      %v171 = vld [vmem:[%s1 + $0x20] sm:$0xf]
      %v172 = vld [vmem:[%s1 + $0x24] sm:$0xf]
      %v173 = vld [vmem:[%s1 + $0x28] sm:$0xf]
      %v174 = vld [vmem:[%s1 + $0x2c] sm:$0xf]
      %v175 = vld [vmem:[%s1 + $0x30] sm:$0xf]
      %v176 = vld [vmem:[%s1 + $0x34] sm:$0xf]
      %v177 = vld [vmem:[%s1 + $0x38] sm:$0xf]
      %v178 = vld [vmem:[%s1 + $0x3c] sm:$0xf]
      %v195 = vunpack.c.l.b16 %v147
      %v196 = vunpack.c.l.b16 %v148
      %v197 = vunpack.c.l.b16 %v149
      %v198 = vunpack.c.l.b16 %v150
      %v199 = vunpack.c.l.b16 %v151
      %v200 = vunpack.c.l.b16 %v152
      %v201 = vunpack.c.l.b16 %v153
      %v202 = vunpack.c.l.b16 %v154
      %v203 = vunpack.c.l.b16 %v155
      %v204 = vunpack.c.l.b16 %v156
      %v205 = vunpack.c.l.b16 %v157
      %v206 = vunpack.c.l.b16 %v158
      %v207 = vunpack.c.l.b16 %v159
      %v208 = vunpack.c.l.b16 %v160
      %v209 = vunpack.c.l.b16 %v161
      %v210 = vunpack.c.l.b16 %v162
      %v211 = vpack.c.b16 %v196, %v195
      %v212 = vpack.c.b16 %v198, %v197
      %v213 = vpack.c.b16 %v200, %v199
      %v214 = vpack.c.b16 %v202, %v201
      %v215 = vpack.c.b16 %v204, %v203
      %v216 = vpack.c.b16 %v206, %v205
      %v217 = vpack.c.b16 %v208, %v207
      %v218 = vpack.c.b16 %v210, %v209
      %v243 = vunpack.c.l.b16 %v163
      %v244 = vunpack.c.l.b16 %v164
      %v245 = vunpack.c.l.b16 %v165
      %v246 = vunpack.c.l.b16 %v166
      %v247 = vunpack.c.l.b16 %v167
      %v248 = vunpack.c.l.b16 %v168
      %v249 = vunpack.c.l.b16 %v169
      %v250 = vunpack.c.l.b16 %v170
      %v251 = vunpack.c.l.b16 %v171
      %v252 = vunpack.c.l.b16 %v172
      %v253 = vunpack.c.l.b16 %v173
      %v254 = vunpack.c.l.b16 %v174
      %v255 = vunpack.c.l.b16 %v175
      %v256 = vunpack.c.l.b16 %v176
      %v257 = vunpack.c.l.b16 %v177
      %v258 = vunpack.c.l.b16 %v178
      %v259 = vpack.c.b16 %v244, %v243
      %v260 = vpack.c.b16 %v246, %v245
      %v261 = vpack.c.b16 %v248, %v247
      %v262 = vpack.c.b16 %v250, %v249
      %v263 = vpack.c.b16 %v252, %v251
      %v264 = vpack.c.b16 %v254, %v253
      %v265 = vpack.c.b16 %v256, %v255
      %v266 = vpack.c.b16 %v258, %v257
      %275 = vmatpush.bf16.msra.mxu0 %v266
      %276 = vmatpush.bf16.msra.mxu0 %v265
      %277 = vmatpush.bf16.msra.mxu0 %v264
      %278 = vmatpush.bf16.msra.mxu0 %v263
      %279 = vmatpush.bf16.msra.mxu0 %v262
      %280 = vmatpush.bf16.msra.mxu0 %v261
      %281 = vmatpush.bf16.msra.mxu0 %v260
      %282 = vmatpush.bf16.msra.mxu0 %v259
      %283 = vmatmul.bf16.gmra.mxu0 %v211
      %v284 = vpop.f32.mrf.mxu0
      %v285 = vadd.f32 0.0, %v284
      %v286 = vpop.f32.mrf.mxu0
      %v287 = vadd.f32 0.0, %v286
      %288 = vmatmul.bf16.gmra.mxu0 %v212
      %v289 = vpop.f32.mrf.mxu0
      %v290 = vadd.f32 0.0, %v289
      %v291 = vpop.f32.mrf.mxu0
      %v292 = vadd.f32 0.0, %v291
      %293 = vmatmul.bf16.gmra.mxu0 %v213
      %v294 = vpop.f32.mrf.mxu0
      %v295 = vadd.f32 0.0, %v294
      %v296 = vpop.f32.mrf.mxu0
      %v297 = vadd.f32 0.0, %v296
      %298 = vmatmul.bf16.gmra.mxu0 %v214
      %v299 = vpop.f32.mrf.mxu0
      %v300 = vadd.f32 0.0, %v299
      %v301 = vpop.f32.mrf.mxu0
      %v302 = vadd.f32 0.0, %v301
      %303 = vmatmul.bf16.gmra.mxu0 %v215
      %v304 = vpop.f32.mrf.mxu0
      %v305 = vadd.f32 0.0, %v304
      %v306 = vpop.f32.mrf.mxu0
      %v307 = vadd.f32 0.0, %v306
      %308 = vmatmul.bf16.gmra.mxu0 %v216
      %v309 = vpop.f32.mrf.mxu0
      %v310 = vadd.f32 0.0, %v309
      %v311 = vpop.f32.mrf.mxu0
      %v312 = vadd.f32 0.0, %v311
      %313 = vmatmul.bf16.gmra.mxu0 %v217
      %v314 = vpop.f32.mrf.mxu0
      %v315 = vadd.f32 0.0, %v314
      %v316 = vpop.f32.mrf.mxu0
      %v317 = vadd.f32 0.0, %v316
      %318 = vmatmul.bf16.gmra.mxu0 %v218
      %v319 = vpop.f32.mrf.mxu0
      %v320 = vadd.f32 0.0, %v319
      %v321 = vpop.f32.mrf.mxu0
      %v322 = vadd.f32 0.0, %v321
      %323 = vdwg.mxu0
      %v324 = vpack.c.bf16 %v285, %v285
      %v325 = vpack.c.bf16 %v287, %v287
      %v326 = vpack.c.bf16 %v290, %v290
      %v327 = vpack.c.bf16 %v292, %v292
      %v328 = vpack.c.bf16 %v295, %v295
      %v329 = vpack.c.bf16 %v297, %v297
      %v330 = vpack.c.bf16 %v300, %v300
      %v331 = vpack.c.bf16 %v302, %v302
      %v332 = vpack.c.bf16 %v305, %v305
      %v333 = vpack.c.bf16 %v307, %v307
      %v334 = vpack.c.bf16 %v310, %v310
      %v335 = vpack.c.bf16 %v312, %v312
      %v336 = vpack.c.bf16 %v315, %v315
      %v337 = vpack.c.bf16 %v317, %v317
      %v338 = vpack.c.bf16 %v320, %v320
      %v339 = vpack.c.bf16 %v322, %v322
      %340 = vst [vmem:[%s145] sm:$0xf] %v324
      %341 = vst [vmem:[%s145 + $0x4] sm:$0xf] %v325
      %342 = vst [vmem:[%s145 + $0x8] sm:$0xf] %v326
      %343 = vst [vmem:[%s145 + $0xc] sm:$0xf] %v327
      %344 = vst [vmem:[%s145 + $0x10] sm:$0xf] %v328
      %345 = vst [vmem:[%s145 + $0x14] sm:$0xf] %v329
      %346 = vst [vmem:[%s145 + $0x18] sm:$0xf] %v330
      %347 = vst [vmem:[%s145 + $0x1c] sm:$0xf] %v331
      %348 = vst [vmem:[%s145 + $0x20] sm:$0xf] %v332
      %349 = vst [vmem:[%s145 + $0x24] sm:$0xf] %v333
      %350 = vst [vmem:[%s145 + $0x28] sm:$0xf] %v334
      %351 = vst [vmem:[%s145 + $0x2c] sm:$0xf] %v335
      %352 = vst [vmem:[%s145 + $0x30] sm:$0xf] %v336
      %353 = vst [vmem:[%s145 + $0x34] sm:$0xf] %v337
      %354 = vst [vmem:[%s145 + $0x38] sm:$0xf] %v338
      %355 = vst [vmem:[%s145 + $0x3c] sm:$0xf] %v339
      %s356 = smul.u32 16, %s13
      %p357 = scmp.lt.s32.totalorder %s356, 31
      %s358 = scalar_select %p357, %s356, 31
      %s359 = smul.addr %s358, 4
      %s360 = scalar_lea.vmem %s2, %s359
      // Predicated region
      $region29: #{graph_convolution.2} parent=27 // pred_check
        %p361 = pneg %p78
      $region30: #{graph_convolution.2} parent=27 // pred_check_branch
        %363 = sbr.rel (%p361) target = $region32
      $region31: #{graph_convolution.2} parent=27 // pred_region
        %s364 = smul.u32 16, %s13
      $region32: #{graph_convolution.2} parent=27 // pred_fallthru
        _
    $region28: #{graph_convolution.2} parent=5 // pred_fallthru
      _
    %p365 = scmp.le.s32.totalorder 2, %s8
    // Predicated region
    $region33: #{graph_convolution.2} parent=5 // pred_check
      %p366 = pneg %p365
    $region34: #{graph_convolution.2} parent=5 // pred_check_branch
      %368 = sbr.rel (%p366) target = $region36
    $region35: #{graph_convolution.2} parent=5 // pred_region
      %s369 = ssub.s32 %s8, 2
      // Predicated region
      $region37: #{graph_convolution.2} parent=35 // pred_check
        %p370 = pneg %p84
      $region38: #{graph_convolution.2} parent=35 // pred_check_branch
        %372 = sbr.rel (%p370) target = $region40
      $region39: #{graph_convolution.2} parent=35 // pred_region
        %s373 = smul.u32 16, %s14
        %p374 = scmp.lt.s32.totalorder %s373, 31
        %s375 = scalar_select %p374, %s373, 31
        %s376 = smul.addr %s375, 4
        %s377 = scalar_lea.vmem %s2, %s376
      $region40: #{graph_convolution.2} parent=35 // pred_fallthru
        _
    $region36: #{graph_convolution.2} parent=5 // pred_fallthru
      _
  $region6: #{graph_convolution.2} parent=0 // loop_footer
    %s12 = sadd.s32 1, %s8
  $region7: #{graph_convolution.2} parent=0 // loop_footer_branch
    %7 = sbr.rel target = $region3
  $region8: #{graph_convolution.2} parent=0 // loop_exit
    _

</llo_original>
